<compile_context>
chip_gen: v5e
topology: v5e:2x2
jax: 0.10.0
libtpu: 0.0.40
codegen_flags: <defaults>
</compile_context>

<pallas_src>
import functools
import math

import jax
import jax.numpy as jnp
from jax.experimental import pallas as pl
from jax.experimental.pallas import tpu as pltpu


def _mha_head_kernel(x_ref, wq_ref, wk_ref, wv_ref, wp_ref, b_ref,
                     o_ref, acc_ref):
    """One (batch, head) grid step: full attention for one head, accumulate its
    contribution to the output projection into the f32 scratch accumulator."""
    h = pl.program_id(1)

    @pl.when(h == 0)
    def _init():
        # Seed the accumulator with the projection bias (added exactly once).
        acc_ref[...] = jnp.broadcast_to(
            b_ref[...].astype(jnp.float32), acc_ref.shape)

    x = x_ref[0]                        # (N, C), input dtype
    cdt = x.dtype                       # MXU operand dtype (bf16 if inputs are bf16)

    # Head projections: operands in input dtype, f32 accumulation on the MXU.
    # The softmax scale is already folded into wq (done once in the wrapper).
    q = jnp.dot(x, wq_ref[0], preferred_element_type=jnp.float32)   # (N, hd) f32
    k = jnp.dot(x, wk_ref[0], preferred_element_type=jnp.float32)   # (N, hd) f32
    v = jnp.dot(x, wv_ref[0], preferred_element_type=jnp.float32)   # (N, hd) f32

    # Scores + numerically-stable softmax, kept in f32.
    s = jnp.dot(q.astype(cdt), k.astype(cdt).T,
                preferred_element_type=jnp.float32)                  # (N, N) f32
    m = jnp.max(s, axis=-1, keepdims=True)
    e = jnp.exp(s - m)
    p = (e / jnp.sum(e, axis=-1, keepdims=True)).astype(cdt)

    o_h = jnp.dot(p, v.astype(cdt), preferred_element_type=jnp.float32)  # (N, hd) f32

    # This head's contribution to the output projection, accumulated in f32.
    acc_ref[...] += jnp.dot(o_h.astype(cdt), wp_ref[0],
                            preferred_element_type=jnp.float32)           # (N, C) f32

    @pl.when(h == pl.num_programs(1) - 1)
    def _finalize():
        o_ref[0] = acc_ref[...].astype(o_ref.dtype)    # single lane-dense store


def decoder_attention_centers(x, w_qkv, w_proj, b_proj, *, num_heads):
    """x: (B, N, C); w_qkv: (C, 3C) in `x @ W` layout; w_proj: (C, C); b_proj: (1, C)."""
    B, N, C = x.shape
    H = num_heads
    assert C % H == 0, "dim should be divisible by num_heads"
    hd = C // H
    scale = hd ** (-0.5)
    cdt = x.dtype

    # Per-head weight slabs, prepared once outside the kernel (plain XLA ops).
    # The 3C columns of w_qkv are laid out [q | k | v], head-major within each,
    # matching torch's reshape(B, N, 3, H, hd).
    w_q = (w_qkv[:, 0 * C:1 * C].reshape(C, H, hd).transpose(1, 0, 2)
           * scale).astype(cdt)                                         # (H, C, hd)
    w_k = w_qkv[:, 1 * C:2 * C].reshape(C, H, hd).transpose(1, 0, 2).astype(cdt)
    w_v = w_qkv[:, 2 * C:3 * C].reshape(C, H, hd).transpose(1, 0, 2).astype(cdt)
    w_p = w_proj.reshape(H, hd, C).astype(cdt)                          # (H, hd, C)

    return pl.pallas_call(
        _mha_head_kernel,
        out_shape=jax.ShapeDtypeStruct((B, N, C), x.dtype),
        grid_spec=pltpu.PrefetchScalarGridSpec(
            num_scalar_prefetch=0,
            grid=(B, H),
            in_specs=[
                pl.BlockSpec((1, N, C), lambda b, h: (b, 0, 0)),    # x (resident over heads)
                pl.BlockSpec((1, C, hd), lambda b, h: (h, 0, 0)),   # W_q[h] (scale folded)
                pl.BlockSpec((1, C, hd), lambda b, h: (h, 0, 0)),   # W_k[h]
                pl.BlockSpec((1, C, hd), lambda b, h: (h, 0, 0)),   # W_v[h]
                pl.BlockSpec((1, hd, C), lambda b, h: (h, 0, 0)),   # W_proj[h]
                pl.BlockSpec((1, C), lambda b, h: (0, 0)),          # proj bias (resident)
            ],
            out_specs=pl.BlockSpec((1, N, C), lambda b, h: (b, 0, 0)),
            scratch_shapes=[pltpu.VMEM((N, C), jnp.float32)],       # f32 proj accumulator
        ),
        compiler_params=pltpu.CompilerParams(
            dimension_semantics=("parallel", "arbitrary")),
    )(x, w_q, w_k, w_v, w_p, b_proj)


def reference_attention(x, w_qkv, w_proj, b_proj, num_heads):
    B, N, C = x.shape
    hd = C // num_heads
    scale = hd ** (-0.5)
    hi = jax.lax.Precision.HIGHEST
    qkv = jnp.einsum('bnc,cd->bnd', x, w_qkv, precision=hi)            # (B, N, 3C)
    qkv = qkv.reshape(B, N, 3, num_heads, hd).transpose(2, 0, 3, 1, 4)
    q, k, v = qkv[0], qkv[1], qkv[2]                                   # (B, H, N, hd)
    attn = jnp.einsum('bhqd,bhkd->bhqk', q, k, precision=hi) * scale
    attn = jax.nn.softmax(attn, axis=-1)
    out = jnp.einsum('bhqk,bhkd->bhqd', attn, v, precision=hi)         # (B, H, N, hd)
    out = out.transpose(0, 2, 1, 3).reshape(B, N, C)
    return jnp.einsum('bnc,cd->bnd', out, w_proj, precision=hi) + b_proj[0]


if __name__ == "__main__":
    # Small but lane-dense shapes (C = 128 keeps the final store unmasked).
    B, N, C = 2, 16, 128
    num_heads = 8

    key = jax.random.PRNGKey(0)
    kx, kqkv, kproj, kb = jax.random.split(key, 4)

    x = jax.random.normal(kx, (B, N, C), dtype=jnp.float32)

    # Deterministic parameter init (uniform, similar scale to nn.Linear defaults).
    bound = 1.0 / math.sqrt(C)
    w_qkv = jax.random.uniform(kqkv, (C, 3 * C), jnp.float32, -bound, bound)
    w_proj = jax.random.uniform(kproj, (C, C), jnp.float32, -bound, bound)
    b_proj = jax.random.uniform(kb, (1, C), jnp.float32, -bound, bound)

    out = decoder_attention_centers(x, w_qkv, w_proj, b_proj, num_heads=num_heads)
    out = jax.block_until_ready(out)

    ref = reference_attention(x, w_qkv, w_proj, b_proj, num_heads)
    assert out.shape == (B, N, C)
    max_err = float(jnp.max(jnp.abs(out - ref)))
    assert jnp.allclose(out, ref, atol=1e-4, rtol=1e-4), f"mismatch vs reference: {max_err}"

    print("KERNEL_OK")
</pallas_src>

<mosaic_0001>
module attributes {stable_mosaic.version = 11 : i64} {
  func.func @_mha_head_kernel(%arg0: i32, %arg1: i32, %arg2: memref<1x16x128xf32, #tpu.memory_space<vmem>>, %arg3: memref<1x128x16xf32, #tpu.memory_space<vmem>>, %arg4: memref<1x128x16xf32, #tpu.memory_space<vmem>>, %arg5: memref<1x128x16xf32, #tpu.memory_space<vmem>>, %arg6: memref<1x16x128xf32, #tpu.memory_space<vmem>>, %arg7: memref<1x128xf32, #tpu.memory_space<vmem>>, %arg8: memref<1x16x128xf32, #tpu.memory_space<vmem>>, %arg9: memref<16x128xf32, #tpu.memory_space<vmem>>) attributes {dimension_semantics = [#tpu.dimension_semantics<parallel>, #tpu.dimension_semantics<arbitrary>], iteration_bounds = array<i64: 2, 8>, scalar_prefetch = 0 : i64, scratch_operands = 1 : i64, tpu.core_type = #tpu.core_type<tc>, window_params = [{transform_indices = @transform_0, window_bounds = array<i64: 1, 16, 128>}, {transform_indices = @transform_1, window_bounds = array<i64: 1, 128, 16>}, {transform_indices = @transform_2, window_bounds = array<i64: 1, 128, 16>}, {transform_indices = @transform_3, window_bounds = array<i64: 1, 128, 16>}, {transform_indices = @transform_4, window_bounds = array<i64: 1, 16, 128>}, {pipeline_mode = #tpu.pipeline_mode<synchronous>, transform_indices = @transform_5, window_bounds = array<i64: 1, 128>}, {transform_indices = @transform_6, window_bounds = array<i64: 1, 16, 128>}]} {
    %c0_i32 = arith.constant 0 : i32
    %0 = arith.cmpi eq, %arg1, %c0_i32 : i32
    %1 = arith.extui %0 : i1 to i32
    %c0_i32_0 = arith.constant 0 : i32
    %2 = arith.cmpi ne, %1, %c0_i32_0 : i32
    scf.if %2 {
      %c0_27 = arith.constant 0 : index
      %c0_28 = arith.constant 0 : index
      %35 = vector.load %arg7[%c0_27, %c0_28] : memref<1x128xf32, #tpu.memory_space<vmem>>, vector<1x128xf32>
      %36 = vector.shape_cast %35 : vector<1x128xf32> to vector<1x128xf32>
      %37 = vector.broadcast %36 : vector<1x128xf32> to vector<16x128xf32>
      %c0_29 = arith.constant 0 : index
      %c0_30 = arith.constant 0 : index
      %38 = vector.load %arg9[%c0_29, %c0_30] : memref<16x128xf32, #tpu.memory_space<vmem>>, vector<16x128xf32>
      tpu.vector_store %arg9[%c0_29, %c0_30], %37 {strides = array<i32>} : memref<16x128xf32, #tpu.memory_space<vmem>>, vector<16x128xf32>,
    } else {
    }
    %c0 = arith.constant 0 : index
    %c0_1 = arith.constant 0 : index
    %c0_2 = arith.constant 0 : index
    %3 = vector.load %arg2[%c0, %c0_1, %c0_2] : memref<1x16x128xf32, #tpu.memory_space<vmem>>, vector<1x16x128xf32>
    %4 = vector.shape_cast %3 : vector<1x16x128xf32> to vector<16x128xf32>
    %c0_3 = arith.constant 0 : index
    %c0_4 = arith.constant 0 : index
    %c0_5 = arith.constant 0 : index
    %5 = vector.load %arg3[%c0_3, %c0_4, %c0_5] : memref<1x128x16xf32, #tpu.memory_space<vmem>>, vector<1x128x16xf32>
    %6 = vector.shape_cast %5 : vector<1x128x16xf32> to vector<128x16xf32>
    %cst = arith.constant dense<0.000000e+00> : vector<16x16xf32>
    %7 = tpu.matmul %4, %6, %cst {dimension_numbers = #tpu.dot_dimension_numbers<[1], [0], [0], [1], [0, 0, 1, 1], [], []>} : vector<16x128xf32>, vector<128x16xf32>, vector<16x16xf32> -> vector<16x16xf32>
    %c0_6 = arith.constant 0 : index
    %c0_7 = arith.constant 0 : index
    %c0_8 = arith.constant 0 : index
    %8 = vector.load %arg4[%c0_6, %c0_7, %c0_8] : memref<1x128x16xf32, #tpu.memory_space<vmem>>, vector<1x128x16xf32>
    %9 = vector.shape_cast %8 : vector<1x128x16xf32> to vector<128x16xf32>
    %cst_9 = arith.constant dense<0.000000e+00> : vector<16x16xf32>
    %10 = tpu.matmul %4, %9, %cst_9 {dimension_numbers = #tpu.dot_dimension_numbers<[1], [0], [0], [1], [0, 0, 1, 1], [], []>} : vector<16x128xf32>, vector<128x16xf32>, vector<16x16xf32> -> vector<16x16xf32>
    %c0_10 = arith.constant 0 : index
    %c0_11 = arith.constant 0 : index
    %c0_12 = arith.constant 0 : index
    %11 = vector.load %arg5[%c0_10, %c0_11, %c0_12] : memref<1x128x16xf32, #tpu.memory_space<vmem>>, vector<1x128x16xf32>
    %12 = vector.shape_cast %11 : vector<1x128x16xf32> to vector<128x16xf32>
    %cst_13 = arith.constant dense<0.000000e+00> : vector<16x16xf32>
    %13 = tpu.matmul %4, %12, %cst_13 {dimension_numbers = #tpu.dot_dimension_numbers<[1], [0], [0], [1], [0, 0, 1, 1], [], []>} : vector<16x128xf32>, vector<128x16xf32>, vector<16x16xf32> -> vector<16x16xf32>
    %14 = tpu.transpose %10, [1, 0] : vector<16x16xf32> -> vector<16x16xf32>
    %cst_14 = arith.constant dense<0.000000e+00> : vector<16x16xf32>
    %15 = tpu.matmul %7, %14, %cst_14 {dimension_numbers = #tpu.dot_dimension_numbers<[1], [0], [0], [1], [0, 0, 1, 1], [], []>} : vector<16x16xf32>, vector<16x16xf32>, vector<16x16xf32> -> vector<16x16xf32>
    %cst_15 = arith.constant dense<0xFF800000> : vector<16xf32>
    %16 = vector.multi_reduction <maximumf>, %15, %cst_15 [1] : vector<16x16xf32> to vector<16xf32>
    %17 = vector.shape_cast %16 : vector<16xf32> to vector<16x1xf32>
    %18 = vector.broadcast %17 : vector<16x1xf32> to vector<16x16xf32>
    %19 = arith.subf %15, %18 : vector<16x16xf32>
    %20 = math.exp %19 : vector<16x16xf32>
    %cst_16 = arith.constant dense<0.000000e+00> : vector<16xf32>
    %21 = vector.multi_reduction <add>, %20, %cst_16 [1] : vector<16x16xf32> to vector<16xf32>
    %22 = vector.shape_cast %21 : vector<16xf32> to vector<16x1xf32>
    %23 = vector.broadcast %22 : vector<16x1xf32> to vector<16x16xf32>
    %24 = arith.divf %20, %23 : vector<16x16xf32>
    %cst_17 = arith.constant dense<0.000000e+00> : vector<16x16xf32>
    %25 = tpu.matmul %24, %13, %cst_17 {dimension_numbers = #tpu.dot_dimension_numbers<[1], [0], [0], [1], [0, 0, 1, 1], [], []>} : vector<16x16xf32>, vector<16x16xf32>, vector<16x16xf32> -> vector<16x16xf32>
    %c0_18 = arith.constant 0 : index
    %c0_19 = arith.constant 0 : index
    %26 = vector.load %arg9[%c0_18, %c0_19] : memref<16x128xf32, #tpu.memory_space<vmem>>, vector<16x128xf32>
    %c0_20 = arith.constant 0 : index
    %c0_21 = arith.constant 0 : index
    %c0_22 = arith.constant 0 : index
    %27 = vector.load %arg6[%c0_20, %c0_21, %c0_22] : memref<1x16x128xf32, #tpu.memory_space<vmem>>, vector<1x16x128xf32>
    %28 = vector.shape_cast %27 : vector<1x16x128xf32> to vector<16x128xf32>
    %cst_23 = arith.constant dense<0.000000e+00> : vector<16x128xf32>
    %29 = tpu.matmul %25, %28, %cst_23 {dimension_numbers = #tpu.dot_dimension_numbers<[1], [0], [0], [1], [0, 0, 1, 1], [], []>} : vector<16x16xf32>, vector<16x128xf32>, vector<16x128xf32> -> vector<16x128xf32>
    %30 = arith.addf %26, %29 : vector<16x128xf32>
    %c0_24 = arith.constant 0 : index
    %c0_25 = arith.constant 0 : index
    %31 = vector.load %arg9[%c0_24, %c0_25] : memref<16x128xf32, #tpu.memory_space<vmem>>, vector<16x128xf32>
    tpu.vector_store %arg9[%c0_24, %c0_25], %30 {strides = array<i32>} : memref<16x128xf32, #tpu.memory_space<vmem>>, vector<16x128xf32>,
    %c7_i32 = arith.constant 7 : i32
    %32 = arith.cmpi eq, %arg1, %c7_i32 : i32
    %33 = arith.extui %32 : i1 to i32
    %c0_i32_26 = arith.constant 0 : i32
    %34 = arith.cmpi ne, %33, %c0_i32_26 : i32
    scf.if %34 {
      %c0_27 = arith.constant 0 : index
      %c0_28 = arith.constant 0 : index
      %35 = vector.load %arg9[%c0_27, %c0_28] : memref<16x128xf32, #tpu.memory_space<vmem>>, vector<16x128xf32>
      %c0_29 = arith.constant 0 : index
      %c0_30 = arith.constant 0 : index
      %c0_31 = arith.constant 0 : index
      %36 = vector.load %arg8[%c0_29, %c0_30, %c0_31] : memref<1x16x128xf32, #tpu.memory_space<vmem>>, vector<1x16x128xf32>
      %37 = vector.shape_cast %36 : vector<1x16x128xf32> to vector<16x128xf32>
      %38 = vector.shape_cast %35 : vector<16x128xf32> to vector<1x16x128xf32>
      tpu.vector_store %arg8[%c0_29, %c0_30, %c0_31], %38 {strides = array<i32>} : memref<1x16x128xf32, #tpu.memory_space<vmem>>, vector<1x16x128xf32>,
    } else {
    }
    return
  }
  func.func @transform_0(%arg0: i32, %arg1: i32) -> (i32, i32, i32) {
    %c0_i32 = arith.constant 0 : i32
    %c0_i32_0 = arith.constant 0 : i32
    %c0_i32_1 = arith.constant 0 : i32
    return %arg0, %c0_i32, %c0_i32_0 : i32, i32, i32
  }
  func.func @transform_1(%arg0: i32, %arg1: i32) -> (i32, i32, i32) {
    %c0_i32 = arith.constant 0 : i32
    %c0_i32_0 = arith.constant 0 : i32
    %c0_i32_1 = arith.constant 0 : i32
    return %arg1, %c0_i32, %c0_i32_0 : i32, i32, i32
  }
  func.func @transform_2(%arg0: i32, %arg1: i32) -> (i32, i32, i32) {
    %c0_i32 = arith.constant 0 : i32
    %c0_i32_0 = arith.constant 0 : i32
    %c0_i32_1 = arith.constant 0 : i32
    return %arg1, %c0_i32, %c0_i32_0 : i32, i32, i32
  }
  func.func @transform_3(%arg0: i32, %arg1: i32) -> (i32, i32, i32) {
    %c0_i32 = arith.constant 0 : i32
    %c0_i32_0 = arith.constant 0 : i32
    %c0_i32_1 = arith.constant 0 : i32
    return %arg1, %c0_i32, %c0_i32_0 : i32, i32, i32
  }
  func.func @transform_4(%arg0: i32, %arg1: i32) -> (i32, i32, i32) {
    %c0_i32 = arith.constant 0 : i32
    %c0_i32_0 = arith.constant 0 : i32
    %c0_i32_1 = arith.constant 0 : i32
    return %arg1, %c0_i32, %c0_i32_0 : i32, i32, i32
  }
  func.func @transform_5(%arg0: i32, %arg1: i32) -> (i32, i32) {
    %c0_i32 = arith.constant 0 : i32
    %c0_i32_0 = arith.constant 0 : i32
    %c0_i32_1 = arith.constant 0 : i32
    return %c0_i32, %c0_i32_0 : i32, i32
  }
  func.func @transform_6(%arg0: i32, %arg1: i32) -> (i32, i32, i32) {
    %c0_i32 = arith.constant 0 : i32
    %c0_i32_0 = arith.constant 0 : i32
    %c0_i32_1 = arith.constant 0 : i32
    return %arg0, %c0_i32, %c0_i32_0 : i32, i32, i32
  }
}

</mosaic_0001>

<llo_original>
// kernel: tpu_custom_call.1
$region0: #{tpu_custom_call.1}
  #allocation0 [shape = 'u32[]', space=smem, size = 0x4, offset = 0x4, fixed_abs, tag = 'smem constant byte address 0x4 - core index']
  #allocation1 [shape = 'u32[72,128]{1,0:T(1,128)}', space=vmem, size = 0x9000, scoped, tag = 'internal scratch']
  #allocation2 [shape = 'f32[16,128]{1,0:T(8,128)}', space=vmem, size = 0x2000, scoped, tag = 'scratch operand']
  %s0 = inlined_call_operand.vmem [shape: f32[2,16,128], index: 0, kind: input, shape index: {}]
  %s1 = inlined_call_operand.vmem [shape: f32[8,128,16], index: 1, kind: input, shape index: {}]
  %s2 = inlined_call_operand.vmem [shape: f32[8,128,16], index: 2, kind: input, shape index: {}]
  %s3 = inlined_call_operand.vmem [shape: f32[8,128,16], index: 3, kind: input, shape index: {}]
  %s4 = inlined_call_operand.vmem [shape: f32[8,16,128], index: 4, kind: input, shape index: {}]
  %s5 = inlined_call_operand.vmem [shape: f32[1,128], index: 5, kind: input, shape index: {}]
  %s6 = inlined_call_operand.hbm [shape: f32[2,16,128], index: 6, kind: output, shape index: {}]
  %s7 = sld [smem:[#allocation0]]
  $region65: #{tpu_custom_call.1} parent=0
    _
  %s9 = ssub.s32 1, %s7
  %s10 = scalar_select 0, %s9, %s7
  $region1: #{tpu_custom_call.1} parent=0
    #allocation3 [shape = 'u8[16384]{0}', space=vmem, size = 0x4000, scoped, tag = 'output window, operand 0']
    #allocation4 [shape = 's32[2]{0}', space=sflag, size = 0x8, scoped, tag = 'scoped memory for tpu_custom_call.1']
    %11 = vsyncpa [#allocation4], 0
    %s12 = scalar_lea.sflag [#allocation4], 1
    %13 = vsyncpa %s12, 0
    loop: start=0, step=1, limit=18
    $region2: #{tpu_custom_call.1} parent=1 // loop_pre_header
      _
    $region3: #{tpu_custom_call.1} parent=1 // loop_header
      %s15 = sphi 0, %s19
      %p16 = scmp.ge.s32.totalorder %s15, 18
      %s22 = sphi 0, %s34
      %s23 = sphi 0, %s30
      %s24 = sphi 0, %s22
      %s25 = sphi 0, %s23
      %s26 = sphi 0, %s24
      %s27 = sphi 0, %s25
      %s37 = sphi 0, %s39
      %s40 = sphi 0, %s37
      %s41 = sphi 0, %s40
      %s57 = sphi 0, %s41
      %s63 = sphi 0, %s65
      %s66 = sphi 0, %s63
      %s67 = sphi 0, %s66
      %s83 = sphi 0, %s67
      %s89 = sphi 0, %s91
      %s92 = sphi 0, %s89
      %s93 = sphi 0, %s92
      %s109 = sphi 0, %s93
      %s115 = sphi 0, %s117
      %s118 = sphi 0, %s115
      %s119 = sphi 0, %s118
      %s135 = sphi 0, %s119
      %s141 = sphi 0, %s143
      %s144 = sphi 0, %s141
      %s145 = sphi 0, %s144
      %s161 = sphi 0, %s145
      %s165 = sphi 0, %s165
      %s167 = sphi 0, %s165
      %s168 = sphi 0, %s167
      %s182 = sphi 0, %s168
      %s188 = sphi 0, %s190
      %s191 = sphi 0, %s188
      %s192 = sphi 0, %s191
      %s208 = sphi 0, %s192
    $region4: #{tpu_custom_call.1} parent=1 // loop_header_branch
      %18 = sbr.rel (%p16) target = $region8
    $region5: #{tpu_custom_call.1} parent=1 // loop_body
      %s20 = ssub.s32 %s15, 1
      %s21 = ssub.s32 %s15, 2
      %s28 = sadd.s32 1, %s23
      %p29 = scmp.ge.s32.totalorder %s28, 8
      %s30 = scalar_select %p29, 0, %s28
      %s31 = sadd.s32 1, %s22
      %s32 = scalar_select %p29, %s31, %s22
      %p33 = scmp.ge.s32.totalorder %s32, 2
      %s34 = scalar_select %p33, 0, %s32
      %s35 = ssub.s32 %s22, %s34
      %p36 = scmp.eq.s32.totalorder %s35, 0
      %s38 = sadd.s32 %s37, 1
      %s39 = scalar_select %p36, %s37, %s38
      %p42 = pneg %p36
      %p43 = scmp.eq.s32.totalorder %s15, 15
      %p44 = por %p42, %p43
      %p45 = scmp.ne.s32.totalorder %s37, %s40
      %p46 = scmp.eq.s32.totalorder %s15, 0
      %p47 = por %p45, %p46
      %p48 = scmp.ne.s32.totalorder %s37, %s40
      %p49 = scmp.eq.s32.totalorder %s20, 15
      %p50 = por %p48, %p49
      %p51 = scmp.ne.s32.totalorder %s40, %s41
      %p52 = scmp.eq.s32.totalorder %s20, 0
      %p53 = por %p51, %p52
      %p54 = scmp.ne.s32.totalorder %s40, %s41
      %p55 = scmp.eq.s32.totalorder %s21, 15
      %p56 = por %p54, %p55
      %p58 = scmp.ne.s32.totalorder %s41, %s57
      %p59 = scmp.eq.s32.totalorder %s21, 0
      %p60 = por %p58, %p59
      %s61 = ssub.s32 %s23, %s30
      %p62 = scmp.eq.s32.totalorder %s61, 0
      %s64 = sadd.s32 %s63, 1
      %s65 = scalar_select %p62, %s63, %s64
      %p68 = pneg %p62
      %p69 = scmp.eq.s32.totalorder %s15, 15
      %p70 = por %p68, %p69
      %p71 = scmp.ne.s32.totalorder %s63, %s66
      %p72 = scmp.eq.s32.totalorder %s15, 0
      %p73 = por %p71, %p72
      %p74 = scmp.ne.s32.totalorder %s63, %s66
      %p75 = scmp.eq.s32.totalorder %s20, 15
      %p76 = por %p74, %p75
      %p77 = scmp.ne.s32.totalorder %s66, %s67
      %p78 = scmp.eq.s32.totalorder %s20, 0
      %p79 = por %p77, %p78
      %p80 = scmp.ne.s32.totalorder %s66, %s67
      %p81 = scmp.eq.s32.totalorder %s21, 15
      %p82 = por %p80, %p81
      %p84 = scmp.ne.s32.totalorder %s67, %s83
      %p85 = scmp.eq.s32.totalorder %s21, 0
      %p86 = por %p84, %p85
      %s87 = ssub.s32 %s23, %s30
      %p88 = scmp.eq.s32.totalorder %s87, 0
      %s90 = sadd.s32 %s89, 1
      %s91 = scalar_select %p88, %s89, %s90
      %p94 = pneg %p88
      %p95 = scmp.eq.s32.totalorder %s15, 15
      %p96 = por %p94, %p95
      %p97 = scmp.ne.s32.totalorder %s89, %s92
      %p98 = scmp.eq.s32.totalorder %s15, 0
      %p99 = por %p97, %p98
      %p100 = scmp.ne.s32.totalorder %s89, %s92
      %p101 = scmp.eq.s32.totalorder %s20, 15
      %p102 = por %p100, %p101
      %p103 = scmp.ne.s32.totalorder %s92, %s93
      %p104 = scmp.eq.s32.totalorder %s20, 0
      %p105 = por %p103, %p104
      %p106 = scmp.ne.s32.totalorder %s92, %s93
      %p107 = scmp.eq.s32.totalorder %s21, 15
      %p108 = por %p106, %p107
      %p110 = scmp.ne.s32.totalorder %s93, %s109
      %p111 = scmp.eq.s32.totalorder %s21, 0
      %p112 = por %p110, %p111
      %s113 = ssub.s32 %s23, %s30
      %p114 = scmp.eq.s32.totalorder %s113, 0
      %s116 = sadd.s32 %s115, 1
      %s117 = scalar_select %p114, %s115, %s116
      %p120 = pneg %p114
      %p121 = scmp.eq.s32.totalorder %s15, 15
      %p122 = por %p120, %p121
      %p123 = scmp.ne.s32.totalorder %s115, %s118
      %p124 = scmp.eq.s32.totalorder %s15, 0
      %p125 = por %p123, %p124
      %p126 = scmp.ne.s32.totalorder %s115, %s118
      %p127 = scmp.eq.s32.totalorder %s20, 15
      %p128 = por %p126, %p127
      %p129 = scmp.ne.s32.totalorder %s118, %s119
      %p130 = scmp.eq.s32.totalorder %s20, 0
      %p131 = por %p129, %p130
      %p132 = scmp.ne.s32.totalorder %s118, %s119
      %p133 = scmp.eq.s32.totalorder %s21, 15
      %p134 = por %p132, %p133
      %p136 = scmp.ne.s32.totalorder %s119, %s135
      %p137 = scmp.eq.s32.totalorder %s21, 0
      %p138 = por %p136, %p137
      %s139 = ssub.s32 %s23, %s30
      %p140 = scmp.eq.s32.totalorder %s139, 0
      %s142 = sadd.s32 %s141, 1
      %s143 = scalar_select %p140, %s141, %s142
      %p146 = pneg %p140
      %p147 = scmp.eq.s32.totalorder %s15, 15
      %p148 = por %p146, %p147
      %p149 = scmp.ne.s32.totalorder %s141, %s144
      %p150 = scmp.eq.s32.totalorder %s15, 0
      %p151 = por %p149, %p150
      %p152 = scmp.ne.s32.totalorder %s141, %s144
      %p153 = scmp.eq.s32.totalorder %s20, 15
      %p154 = por %p152, %p153
      %p155 = scmp.ne.s32.totalorder %s144, %s145
      %p156 = scmp.eq.s32.totalorder %s20, 0
      %p157 = por %p155, %p156
      %p158 = scmp.ne.s32.totalorder %s144, %s145
      %p159 = scmp.eq.s32.totalorder %s21, 15
      %p160 = por %p158, %p159
      %p162 = scmp.ne.s32.totalorder %s145, %s161
      %p163 = scmp.eq.s32.totalorder %s21, 0
      %p164 = por %p162, %p163
      %s166 = sadd.s32 %s165, 1
      %p169 = scmp.eq.s32.totalorder %s15, 15
      %p170 = scmp.ne.s32.totalorder %s165, %s167
      %p171 = scmp.eq.s32.totalorder %s15, 0
      %p172 = por %p170, %p171
      %p173 = scmp.ne.s32.totalorder %s165, %s167
      %p174 = scmp.eq.s32.totalorder %s20, 15
      %p175 = por %p173, %p174
      %p176 = scmp.ne.s32.totalorder %s167, %s168
      %p177 = scmp.eq.s32.totalorder %s20, 0
      %p178 = por %p176, %p177
      %p179 = scmp.ne.s32.totalorder %s167, %s168
      %p180 = scmp.eq.s32.totalorder %s21, 15
      %p181 = por %p179, %p180
      %p183 = scmp.ne.s32.totalorder %s168, %s182
      %p184 = scmp.eq.s32.totalorder %s21, 0
      %p185 = por %p183, %p184
      %s186 = ssub.s32 %s22, %s34
      %p187 = scmp.eq.s32.totalorder %s186, 0
      %s189 = sadd.s32 %s188, 1
      %s190 = scalar_select %p187, %s188, %s189
      %p193 = pneg %p187
      %p194 = scmp.eq.s32.totalorder %s15, 15
      %p195 = por %p193, %p194
      %p196 = scmp.ne.s32.totalorder %s188, %s191
      %p197 = scmp.eq.s32.totalorder %s15, 0
      %p198 = por %p196, %p197
      %p199 = scmp.ne.s32.totalorder %s188, %s191
      %p200 = scmp.eq.s32.totalorder %s20, 15
      %p201 = por %p199, %p200
      %p202 = scmp.ne.s32.totalorder %s191, %s192
      %p203 = scmp.eq.s32.totalorder %s20, 0
      %p204 = por %p202, %p203
      %p205 = scmp.ne.s32.totalorder %s191, %s192
      %p206 = scmp.eq.s32.totalorder %s21, 15
      %p207 = por %p205, %p206
      %p209 = scmp.ne.s32.totalorder %s192, %s208
      %p210 = scmp.eq.s32.totalorder %s21, 0
      %p211 = por %p209, %p210
      %p212 = scmp.le.s32.totalorder 1, %s15
      %p213 = scmp.lt.s32.totalorder %s15, 17
      %p214 = pnand %p212, %p213
      %p215 = pneg %p214
      // Predicated region
      $region9: #{tpu_custom_call.1} parent=5 // pred_check
        _
      $region10: #{tpu_custom_call.1} parent=5 // pred_check_branch
        %217 = sbr.rel (%p214) target = $region12
      $region11: #{tpu_custom_call.1} parent=5 // pred_region
        %s218 = ssub.s32 %s15, 1
        // Predicated region
        $region13: #{tpu_custom_call.1} parent=11 // pred_check
          %p219 = pneg %p178
        $region14: #{tpu_custom_call.1} parent=11 // pred_check_branch
          %221 = sbr.rel (%p219) target = $region16
        $region15: #{tpu_custom_call.1} parent=11 // pred_region
          _
        $region16: #{tpu_custom_call.1} parent=11 // pred_fallthru
          _
      $region12: #{tpu_custom_call.1} parent=5 // pred_fallthru
        _
      %p222 = scmp.lt.s32.totalorder %s15, 16
      // Predicated region
      $region17: #{tpu_custom_call.1} parent=5 // pred_check
        %p223 = pneg %p222
      $region18: #{tpu_custom_call.1} parent=5 // pred_check_branch
        %225 = sbr.rel (%p223) target = $region20
      $region19: #{tpu_custom_call.1} parent=5 // pred_region
        // Predicated region
        $region21: #{tpu_custom_call.1} parent=19 // pred_check
          %p226 = pneg %p47
        $region22: #{tpu_custom_call.1} parent=19 // pred_check_branch
          %228 = sbr.rel (%p226) target = $region24
        $region23: #{tpu_custom_call.1} parent=19 // pred_region
          %p229 = scmp.lt.s32.totalorder %s22, 1
          %s230 = scalar_select %p229, %s22, 1
          %s231 = smul.addr %s230, 2
          %s232 = smul.addr %s231, 8
          %s233 = scalar_lea.vmem %s0, %s232
        $region24: #{tpu_custom_call.1} parent=19 // pred_fallthru
          _
        // Predicated region
        $region25: #{tpu_custom_call.1} parent=19 // pred_check
          %p234 = pneg %p73
        $region26: #{tpu_custom_call.1} parent=19 // pred_check_branch
          %236 = sbr.rel (%p234) target = $region28
        $region27: #{tpu_custom_call.1} parent=19 // pred_region
          %p237 = scmp.lt.s32.totalorder %s23, 7
          %s238 = scalar_select %p237, %s23, 7
          %s239 = smul.addr %s238, 16
          %s240 = smul.addr %s239, 8
          %s241 = scalar_lea.vmem %s1, %s240
        $region28: #{tpu_custom_call.1} parent=19 // pred_fallthru
          _
        // Predicated region
        $region29: #{tpu_custom_call.1} parent=19 // pred_check
          %p242 = pneg %p99
        $region30: #{tpu_custom_call.1} parent=19 // pred_check_branch
          %244 = sbr.rel (%p242) target = $region32
        $region31: #{tpu_custom_call.1} parent=19 // pred_region
          %p245 = scmp.lt.s32.totalorder %s23, 7
          %s246 = scalar_select %p245, %s23, 7
          %s247 = smul.addr %s246, 16
          %s248 = smul.addr %s247, 8
          %s249 = scalar_lea.vmem %s2, %s248
        $region32: #{tpu_custom_call.1} parent=19 // pred_fallthru
          _
        // Predicated region
        $region33: #{tpu_custom_call.1} parent=19 // pred_check
          %p250 = pneg %p125
        $region34: #{tpu_custom_call.1} parent=19 // pred_check_branch
          %252 = sbr.rel (%p250) target = $region36
        $region35: #{tpu_custom_call.1} parent=19 // pred_region
          %p253 = scmp.lt.s32.totalorder %s23, 7
          %s254 = scalar_select %p253, %s23, 7
          %s255 = smul.addr %s254, 16
          %s256 = smul.addr %s255, 8
          %s257 = scalar_lea.vmem %s3, %s256
        $region36: #{tpu_custom_call.1} parent=19 // pred_fallthru
          _
        // Predicated region
        $region37: #{tpu_custom_call.1} parent=19 // pred_check
          %p258 = pneg %p151
        $region38: #{tpu_custom_call.1} parent=19 // pred_check_branch
          %260 = sbr.rel (%p258) target = $region40
        $region39: #{tpu_custom_call.1} parent=19 // pred_region
          %p261 = scmp.lt.s32.totalorder %s23, 7
          %s262 = scalar_select %p261, %s23, 7
          %s263 = smul.addr %s262, 2
          %s264 = smul.addr %s263, 8
          %s265 = scalar_lea.vmem %s4, %s264
        $region40: #{tpu_custom_call.1} parent=19 // pred_fallthru
          _
      $region20: #{tpu_custom_call.1} parent=5 // pred_fallthru
        _
      %p266 = scmp.le.s32.totalorder 1, %s15
      %p267 = scmp.lt.s32.totalorder %s15, 17
      %p268 = pnand %p266, %p267
      %p269 = pneg %p268
      // Predicated region
      $region41: #{tpu_custom_call.1} parent=5 // pred_check
        _
      $region42: #{tpu_custom_call.1} parent=5 // pred_check_branch
        %271 = sbr.rel (%p268) target = $region44
      $region43: #{tpu_custom_call.1} parent=5 // pred_region
        %s272 = ssub.s32 %s15, 1
        %p273 = scmp.lt.s32.totalorder %s24, 1
        %s274 = scalar_select %p273, %s24, 1
        %s275 = smul.addr %s274, 2
        %s276 = smul.addr %s275, 8
        %s277 = scalar_lea.vmem %s0, %s276
        %p278 = pneg %p53
        %p279 = pneg %p50
        %p280 = scmp.lt.s32.totalorder %s25, 7
        %s281 = scalar_select %p280, %s25, 7
        %s282 = smul.addr %s281, 16
        %s283 = smul.addr %s282, 8
        %s284 = scalar_lea.vmem %s1, %s283
        %p285 = pneg %p79
        %p286 = pneg %p76
        %p287 = scmp.lt.s32.totalorder %s25, 7
        %s288 = scalar_select %p287, %s25, 7
        %s289 = smul.addr %s288, 16
        %s290 = smul.addr %s289, 8
        %s291 = scalar_lea.vmem %s2, %s290
        %p292 = pneg %p105
        %p293 = pneg %p102
        %p294 = scmp.lt.s32.totalorder %s25, 7
        %s295 = scalar_select %p294, %s25, 7
        %s296 = smul.addr %s295, 16
        %s297 = smul.addr %s296, 8
        %s298 = scalar_lea.vmem %s3, %s297
        %p299 = pneg %p131
        %p300 = pneg %p128
        %p301 = scmp.lt.s32.totalorder %s25, 7
        %s302 = scalar_select %p301, %s25, 7
        %s303 = smul.addr %s302, 2
        %s304 = smul.addr %s303, 8
        %s305 = scalar_lea.vmem %s4, %s304
        %p306 = pneg %p157
        %p307 = pneg %p154
        %p308 = pneg %p178
        %p309 = pneg %p175
        %p310 = pneg %p204
        %p311 = pneg %p201
        %s312 = sand.u32 %s191, 1
        %s313 = scalar_lea.sflag [#allocation4], %s312
        %s314 = sand.u32 %s191, 1
        %s315 = smul.addr %s314, 16
        %s316 = scalar_lea.vmem [#allocation3], %s315
        %p317 = scmp.lt.s32.totalorder %s24, 1
        %s318 = scalar_select %p317, %s24, 1
        %s319 = smul.addr %s318, 2
        %s320 = smul.addr %s319, 8
        %s321 = scalar_lea.vmem %s0, %s320
        %p322 = scmp.lt.s32.totalorder %s25, 7
        %s323 = scalar_select %p322, %s25, 7
        %s324 = smul.addr %s323, 16
        %s325 = smul.addr %s324, 8
        %s326 = scalar_lea.vmem %s1, %s325
        %p327 = scmp.lt.s32.totalorder %s25, 7
        %s328 = scalar_select %p327, %s25, 7
        %s329 = smul.addr %s328, 16
        %s330 = smul.addr %s329, 8
        %s331 = scalar_lea.vmem %s2, %s330
        %p332 = scmp.lt.s32.totalorder %s25, 7
        %s333 = scalar_select %p332, %s25, 7
        %s334 = smul.addr %s333, 16
        %s335 = smul.addr %s334, 8
        %s336 = scalar_lea.vmem %s3, %s335
        %p337 = scmp.lt.s32.totalorder %s25, 7
        %s338 = scalar_select %p337, %s25, 7
        %s339 = smul.addr %s338, 2
        %s340 = smul.addr %s339, 8
        %s341 = scalar_lea.vmem %s4, %s340
        %p342 = scmp.eq.s32.totalorder %s25, 0
        // Predicated region
        $region45: #{tpu_custom_call.1} parent=43 // pred_check
          %p343 = pneg %p342
        $region46: #{tpu_custom_call.1} parent=43 // pred_check_branch
          %345 = sbr.rel (%p343) target = $region48
        $region47: #{tpu_custom_call.1} parent=43 // pred_region
          %v346 = vld [vmem:[%s5] sm:$0x1]
          %v348 = vperm.slane %v346, 0
          %350 = vst [vmem:[#allocation2] sm:$0xff] %v348
          %351 = vst [vmem:[#allocation2 + $0x8] sm:$0xff] %v348
        $region48: #{tpu_custom_call.1} parent=43 // pred_fallthru
          _
        %v352 = vld [vmem:[%s321] sm:$0xff]
        %v353 = vld [vmem:[%s321 + $0x8] sm:$0xff]
        %v354 = vld [vmem:[%s326] sm:$0xff]
        %v355 = vld [vmem:[%s326 + $0x8] sm:$0xff]
        %v356 = vld [vmem:[%s326 + $0x10] sm:$0xff]
        %v357 = vld [vmem:[%s326 + $0x18] sm:$0xff]
        %v358 = vld [vmem:[%s326 + $0x20] sm:$0xff]
        %v359 = vld [vmem:[%s326 + $0x28] sm:$0xff]
        %v360 = vld [vmem:[%s326 + $0x30] sm:$0xff]
        %v361 = vld [vmem:[%s326 + $0x38] sm:$0xff]
        %v362 = vld [vmem:[%s326 + $0x40] sm:$0xff]
        %v363 = vld [vmem:[%s326 + $0x48] sm:$0xff]
        %v364 = vld [vmem:[%s326 + $0x50] sm:$0xff]
        %v365 = vld [vmem:[%s326 + $0x58] sm:$0xff]
        %v366 = vld [vmem:[%s326 + $0x60] sm:$0xff]
        %v367 = vld [vmem:[%s326 + $0x68] sm:$0xff]
        %v368 = vld [vmem:[%s326 + $0x70] sm:$0xff]
        %v369 = vld [vmem:[%s326 + $0x78] sm:$0xff]
        %370 = vmatpush.msra.mxu0 %v369
        %371 = vmatpush.msra.mxu0 %v368
        %372 = vmatpush.msra.mxu0 %v367
        %373 = vmatpush.msra.mxu0 %v366
        %374 = vmatpush.msra.mxu0 %v365
        %375 = vmatpush.msra.mxu0 %v364
        %376 = vmatpush.msra.mxu0 %v363
        %377 = vmatpush.msra.mxu0 %v362
        %378 = vmatpush.msra.mxu0 %v361
        %379 = vmatpush.msra.mxu0 %v360
        %380 = vmatpush.msra.mxu0 %v359
        %381 = vmatpush.msra.mxu0 %v358
        %382 = vmatpush.msra.mxu0 %v357
        %383 = vmatpush.msra.mxu0 %v356
        %384 = vmatpush.msra.mxu0 %v355
        %385 = vmatpush.msra.mxu0 %v354
        %386 = vmatmul.f32.gmra.mxu0 %v352
        %v387 = vpop.f32.mrf.mxu0
        %v388 = vadd.f32 0.0, %v387
        %389 = vmatmul.f32.gmra.mxu0 %v353
        %v390 = vpop.f32.mrf.mxu0
        %v391 = vadd.f32 0.0, %v390
        %392 = vdwg.mxu0
        %v393 = vld [vmem:[%s331] sm:$0xff]
        %v394 = vld [vmem:[%s331 + $0x8] sm:$0xff]
        %v395 = vld [vmem:[%s331 + $0x10] sm:$0xff]
        %v396 = vld [vmem:[%s331 + $0x18] sm:$0xff]
        %v397 = vld [vmem:[%s331 + $0x20] sm:$0xff]
        %v398 = vld [vmem:[%s331 + $0x28] sm:$0xff]
        %v399 = vld [vmem:[%s331 + $0x30] sm:$0xff]
        %v400 = vld [vmem:[%s331 + $0x38] sm:$0xff]
        %v401 = vld [vmem:[%s331 + $0x40] sm:$0xff]
        %v402 = vld [vmem:[%s331 + $0x48] sm:$0xff]
        %v403 = vld [vmem:[%s331 + $0x50] sm:$0xff]
        %v404 = vld [vmem:[%s331 + $0x58] sm:$0xff]
        %v405 = vld [vmem:[%s331 + $0x60] sm:$0xff]
        %v406 = vld [vmem:[%s331 + $0x68] sm:$0xff]
        %v407 = vld [vmem:[%s331 + $0x70] sm:$0xff]
        %v408 = vld [vmem:[%s331 + $0x78] sm:$0xff]
        %409 = vmatpush.msra.mxu0 %v408
        %410 = vmatpush.msra.mxu0 %v407
        %411 = vmatpush.msra.mxu0 %v406
        %412 = vmatpush.msra.mxu0 %v405
        %413 = vmatpush.msra.mxu0 %v404
        %414 = vmatpush.msra.mxu0 %v403
        %415 = vmatpush.msra.mxu0 %v402
        %416 = vmatpush.msra.mxu0 %v401
        %417 = vmatpush.msra.mxu0 %v400
        %418 = vmatpush.msra.mxu0 %v399
        %419 = vmatpush.msra.mxu0 %v398
        %420 = vmatpush.msra.mxu0 %v397
        %421 = vmatpush.msra.mxu0 %v396
        %422 = vmatpush.msra.mxu0 %v395
        %423 = vmatpush.msra.mxu0 %v394
        %424 = vmatpush.msra.mxu0 %v393
        %425 = vmatmul.f32.gmra.mxu0 %v352
        %v426 = vpop.f32.mrf.mxu0
        %v427 = vadd.f32 0.0, %v426
        %428 = vmatmul.f32.gmra.mxu0 %v353
        %v429 = vpop.f32.mrf.mxu0
        %v430 = vadd.f32 0.0, %v429
        %431 = vdwg.mxu0
        %v432 = vld [vmem:[%s336] sm:$0xff]
        %v433 = vld [vmem:[%s336 + $0x8] sm:$0xff]
        %v434 = vld [vmem:[%s336 + $0x10] sm:$0xff]
        %v435 = vld [vmem:[%s336 + $0x18] sm:$0xff]
        %v436 = vld [vmem:[%s336 + $0x20] sm:$0xff]
        %v437 = vld [vmem:[%s336 + $0x28] sm:$0xff]
        %v438 = vld [vmem:[%s336 + $0x30] sm:$0xff]
        %v439 = vld [vmem:[%s336 + $0x38] sm:$0xff]
        %v440 = vld [vmem:[%s336 + $0x40] sm:$0xff]
        %v441 = vld [vmem:[%s336 + $0x48] sm:$0xff]
        %v442 = vld [vmem:[%s336 + $0x50] sm:$0xff]
        %v443 = vld [vmem:[%s336 + $0x58] sm:$0xff]
        %v444 = vld [vmem:[%s336 + $0x60] sm:$0xff]
        %v445 = vld [vmem:[%s336 + $0x68] sm:$0xff]
        %v446 = vld [vmem:[%s336 + $0x70] sm:$0xff]
        %v447 = vld [vmem:[%s336 + $0x78] sm:$0xff]
        %448 = vmatpush.msra.mxu0 %v447
        %449 = vmatpush.msra.mxu0 %v446
        %450 = vmatpush.msra.mxu0 %v445
        %451 = vmatpush.msra.mxu0 %v444
        %452 = vmatpush.msra.mxu0 %v443
        %453 = vmatpush.msra.mxu0 %v442
        %454 = vmatpush.msra.mxu0 %v441
        %455 = vmatpush.msra.mxu0 %v440
        %456 = vmatpush.msra.mxu0 %v439
        %457 = vmatpush.msra.mxu0 %v438
        %458 = vmatpush.msra.mxu0 %v437
        %459 = vmatpush.msra.mxu0 %v436
        %460 = vmatpush.msra.mxu0 %v435
        %461 = vmatpush.msra.mxu0 %v434
        %462 = vmatpush.msra.mxu0 %v433
        %463 = vmatpush.msra.mxu0 %v432
        %464 = vmatmul.f32.gmra.mxu0 %v352
        %v465 = vpop.f32.mrf.mxu0
        %v466 = vadd.f32 0.0, %v465
        %467 = vmatmul.f32.gmra.mxu0 %v353
        %v468 = vpop.f32.mrf.mxu0
        %v469 = vadd.f32 0.0, %v468
        %470 = vdwg.mxu0
        %vm471 = vcmask 130048
        %v473 = vsel %vm471, %v388, 0
        %v476 = vsel %vm471, %v391, 0
        %v479 = vsel %vm471, %v427, 0
        %v482 = vsel %vm471, %v430, 0
        %484 = vmatpush.xpose.msra.mxu0 0.0
        %485 = vmatpush.xpose.msra.mxu0 0.0
        %486 = vmatpush.xpose.msra.mxu0 0.0
        %487 = vmatpush.xpose.msra.mxu0 0.0
        %488 = vmatpush.xpose.msra.mxu0 0.0
        %489 = vmatpush.xpose.msra.mxu0 0.0
        %490 = vmatpush.xpose.msra.mxu0 0.0
        %491 = vmatpush.xpose.msra.mxu0 0.0
        %492 = vmatpush.xpose.msra.mxu0 0.0
        %493 = vmatpush.xpose.msra.mxu0 0.0
        %494 = vmatpush.xpose.msra.mxu0 0.0
        %495 = vmatpush.xpose.msra.mxu0 0.0
        %496 = vmatpush.xpose.msra.mxu0 0.0
        %497 = vmatpush.xpose.msra.mxu0 0.0
        %498 = vmatpush.xpose.msra.mxu0 %v482
        %499 = vmatpush.xpose.msra.mxu0 %v479
        %500 = vmatmul.f32.gmra.mxu0 %v473
        %v501 = vpop.f32.mrf.mxu0
        %v502 = vadd.f32 0.0, %v501
        %503 = vmatmul.f32.gmra.mxu0 %v476
        %v504 = vpop.f32.mrf.mxu0
        %v505 = vadd.f32 0.0, %v504
        %506 = vdwg.mxu0
        %v507 = vsel %vm471, %v502, -inf
        %508 = vmax.xlane.f32.xlu0 %v507
        %v509 = vpop.xlane.xlu0 %508
        %v510 = vsel %vm471, %v505, -inf
        %511 = vmax.xlane.f32.xlu0 %v510
        %v512 = vpop.xlane.xlu0 %511
        %v513 = vsub.f32 %v502, %v509
        %v514 = vsub.f32 %v505, %v512
        %v515 = vmul.f32 %v513, 1.442695
        %v516 = vpow.pop %v515
        %v517 = vmul.f32 %v514, 1.442695
        %v518 = vpow.pop %v517
        %v519 = vsel %vm471, %v516, 0.0
        %520 = vadd.xlane.f32.xlu0 %v519
        %v521 = vpop.xlane.xlu0 %520
        %v522 = vsel %vm471, %v518, 0.0
        %523 = vadd.xlane.f32.xlu0 %v522
        %v524 = vpop.xlane.xlu0 %523
        %v525 = vrcp.pop %v521
        %v526 = vmul.f32 %v521, %v525
        %v527 = vsub.f32 1.0, %v526
        %v528 = vmul.f32 %v525, %v527
        %v529 = vadd.f32 %v525, %v528
        %vm530 = vweird.f32 %v521
        %vm531 = vweird.f32 %v525
        %vm532 = vmor %vm530, %vm531
        %v533 = vsel %vm532, %v525, %v529
        %v534 = vand.u32 2147483647, %v521
        %vm535 = vcmp.eq.f32.partialorder %v534, 8.507059e+37
        %v536 = vand.u32 %v521, 2147483648
        %v537 = vor.u32 1.1754944e-38, %v536
        %v538 = vsel %vm535, %v537, %v533
        %v539 = vmul.f32 %v516, %v538
        %v540 = vrcp.pop %v524
        %v541 = vmul.f32 %v524, %v540
        %v542 = vsub.f32 1.0, %v541
        %v543 = vmul.f32 %v540, %v542
        %v544 = vadd.f32 %v540, %v543
        %vm545 = vweird.f32 %v524
        %vm546 = vweird.f32 %v540
        %vm547 = vmor %vm545, %vm546
        %v548 = vsel %vm547, %v540, %v544
        %v549 = vand.u32 2147483647, %v524
        %vm550 = vcmp.eq.f32.partialorder %v549, 8.507059e+37
        %v551 = vand.u32 %v524, 2147483648
        %v552 = vor.u32 1.1754944e-38, %v551
        %v553 = vsel %vm550, %v552, %v548
        %v554 = vmul.f32 %v518, %v553
        %v556 = vsel %vm471, %v539, 0
        %v559 = vsel %vm471, %v554, 0
        %561 = vmatpush.msra.mxu0 0.0
        %562 = vmatpush.msra.mxu0 0.0
        %563 = vmatpush.msra.mxu0 0.0
        %564 = vmatpush.msra.mxu0 0.0
        %565 = vmatpush.msra.mxu0 0.0
        %566 = vmatpush.msra.mxu0 0.0
        %567 = vmatpush.msra.mxu0 0.0
        %568 = vmatpush.msra.mxu0 0.0
        %569 = vmatpush.msra.mxu0 0.0
        %570 = vmatpush.msra.mxu0 0.0
        %571 = vmatpush.msra.mxu0 0.0
        %572 = vmatpush.msra.mxu0 0.0
        %573 = vmatpush.msra.mxu0 0.0
        %574 = vmatpush.msra.mxu0 0.0
        %575 = vmatpush.msra.mxu0 %v469
        %576 = vmatpush.msra.mxu0 %v466
        %577 = vmatmul.f32.gmra.mxu0 %v556
        %v578 = vpop.f32.mrf.mxu0
        %v579 = vadd.f32 0.0, %v578
        %580 = vmatmul.f32.gmra.mxu0 %v559
        %v581 = vpop.f32.mrf.mxu0
        %v582 = vadd.f32 0.0, %v581
        %583 = vdwg.mxu0
        %v584 = vld [vmem:[#allocation2] sm:$0xff]
        %v585 = vld [vmem:[#allocation2 + $0x8] sm:$0xff]
        %v586 = vld [vmem:[%s341] sm:$0xff]
        %v587 = vld [vmem:[%s341 + $0x8] sm:$0xff]
        %v589 = vsel %vm471, %v579, 0
        %v592 = vsel %vm471, %v582, 0
        %594 = vmatpush.msra.mxu0 0.0
        %595 = vmatpush.msra.mxu0 0.0
        %596 = vmatpush.msra.mxu0 0.0
        %597 = vmatpush.msra.mxu0 0.0
        %598 = vmatpush.msra.mxu0 0.0
        %599 = vmatpush.msra.mxu0 0.0
        %600 = vmatpush.msra.mxu0 0.0
        %601 = vmatpush.msra.mxu0 0.0
        %602 = vmatpush.msra.mxu0 0.0
        %603 = vmatpush.msra.mxu0 0.0
        %604 = vmatpush.msra.mxu0 0.0
        %605 = vmatpush.msra.mxu0 0.0
        %606 = vmatpush.msra.mxu0 0.0
        %607 = vmatpush.msra.mxu0 0.0
        %608 = vmatpush.msra.mxu0 %v587
        %609 = vmatpush.msra.mxu0 %v586
        %610 = vmatmul.f32.gmra.mxu0 %v589
        %v611 = vpop.f32.mrf.mxu0
        %v612 = vadd.f32 0.0, %v611
        %613 = vmatmul.f32.gmra.mxu0 %v592
        %v614 = vpop.f32.mrf.mxu0
        %v615 = vadd.f32 0.0, %v614
        %616 = vdwg.mxu0
        %v617 = vadd.f32 %v584, %v612
        %v618 = vadd.f32 %v585, %v615
        %619 = vst [vmem:[#allocation2] sm:$0xff] %v617
        %620 = vst [vmem:[#allocation2 + $0x8] sm:$0xff] %v618
        %p621 = scmp.eq.s32.totalorder %s25, 7
        // Predicated region
        $region49: #{tpu_custom_call.1} parent=43 // pred_check
          %p622 = pneg %p621
        $region50: #{tpu_custom_call.1} parent=43 // pred_check_branch
          %624 = sbr.rel (%p622) target = $region52
        $region51: #{tpu_custom_call.1} parent=43 // pred_region
          %v625 = vld [vmem:[#allocation2] sm:$0xff]
          %v626 = vld [vmem:[#allocation2 + $0x8] sm:$0xff]
          %627 = vst [vmem:[%s316] sm:$0xff] %v625
          %628 = vst [vmem:[%s316 + $0x8] sm:$0xff] %v626
        $region52: #{tpu_custom_call.1} parent=43 // pred_fallthru
          _
        %s629 = sand.u32 %s191, 1
        %s630 = scalar_lea.sflag [#allocation4], %s629
        %s631 = sand.u32 %s191, 1
        %s632 = smul.addr %s631, 16
        %s633 = scalar_lea.vmem [#allocation3], %s632
        // Predicated region
        $region53: #{tpu_custom_call.1} parent=43 // pred_check
          %p634 = pneg %p201
        $region54: #{tpu_custom_call.1} parent=43 // pred_check_branch
          %636 = sbr.rel (%p634) target = $region56
        $region55: #{tpu_custom_call.1} parent=43 // pred_region
          %638 = vsyncadd %s630, 0
          %s639 = smul.addr %s24, 2
          %s640 = smul.addr %s639, 8
          %s641 = scalar_lea.hbm %s6, %s640
          %s642 = sshll.u32 %s633, 4
          %s643 = int_to_ptr.vmem [resolvable:$true] %s642
          %s644 = sshll.u32 %s641, 4
          %s645 = int_to_ptr.hbm [resolvable:$true] %s644
          %650 = dma.vmem_to_hbm [thread:$0]  %s643, 256, %s645, %s630, 128, 128, 8
        $region56: #{tpu_custom_call.1} parent=43 // pred_fallthru
          _
      $region44: #{tpu_custom_call.1} parent=5 // pred_fallthru
        _
      %p651 = scmp.le.s32.totalorder 2, %s15
      // Predicated region
      $region57: #{tpu_custom_call.1} parent=5 // pred_check
        %p652 = pneg %p651
      $region58: #{tpu_custom_call.1} parent=5 // pred_check_branch
        %654 = sbr.rel (%p652) target = $region60
      $region59: #{tpu_custom_call.1} parent=5 // pred_region
        %s655 = ssub.s32 %s15, 2
        // Predicated region
        $region61: #{tpu_custom_call.1} parent=59 // pred_check
          %p656 = pneg %p207
        $region62: #{tpu_custom_call.1} parent=59 // pred_check_branch
          %658 = sbr.rel (%p656) target = $region64
        $region63: #{tpu_custom_call.1} parent=59 // pred_region
          %s659 = sand.u32 %s192, 1
          %s660 = scalar_lea.sflag [#allocation4], %s659
          %s661 = sand.u32 %s192, 1
          %s662 = smul.addr %s661, 16
          %s663 = scalar_lea.vmem [#allocation3], %s662
          %665 = dma.done %s660, 256
        $region64: #{tpu_custom_call.1} parent=59 // pred_fallthru
          _
      $region60: #{tpu_custom_call.1} parent=5 // pred_fallthru
        _
    $region6: #{tpu_custom_call.1} parent=1 // loop_footer
      %s19 = sadd.s32 1, %s15
    $region7: #{tpu_custom_call.1} parent=1 // loop_footer_branch
      %14 = sbr.rel target = $region3
    $region8: #{tpu_custom_call.1} parent=1 // loop_exit
      _
    %666 = vsyncpa [#allocation4], 1
    %s667 = scalar_lea.sflag [#allocation4], 1
    %668 = vsyncpa %s667, 1

</llo_original>
